<compile_context>
chip_gen: v7x
topology: tpu7x:2x2x1
jax: 0.10.0
libtpu: 0.0.40
codegen_flags: <defaults>
</compile_context>

<pallas_src>
import functools

import jax
import jax.numpy as jnp
from jax.experimental import pallas as pl
from jax.experimental.pallas import tpu as pltpu


# ---------------------------------------------------------------------------
# Fused SIREN layer: o = sin(w0 * (x @ W + b))   (or identity epilogue)
# ---------------------------------------------------------------------------
def _siren_layer_kernel(x_ref, w_ref, b_ref, o_ref, acc_ref, *, w0, apply_sine):
    k = pl.program_id(2)

    @pl.when(k == 0)
    def _():
        acc_ref[...] = jnp.zeros_like(acc_ref)

    acc_ref[...] += jnp.dot(
        x_ref[...], w_ref[...], preferred_element_type=jnp.float32
    )

    @pl.when(k == pl.num_programs(2) - 1)
    def _():
        # Epilogue entirely in f32 (matches fp32 torch semantics even for bf16
        # inputs), single cast on the way out. Activation is fused here so the
        # layer output never makes an extra HBM round trip.
        z = acc_ref[...] + b_ref[...].astype(jnp.float32)
        if apply_sine:
            if w0 != 1.0:          # static specialization: skip the mul for w0 == 1
                z = w0 * z
            z = jnp.sin(z)
        o_ref[...] = z.astype(o_ref.dtype)


def _pick_tile(dim, max_tile, align):
    """Largest t <= max_tile with dim % t == 0 and (t % align == 0 or t == dim).

    Exact divisors only -> no masked partial blocks in the K reduction and no
    padding / slicing around the kernel. Full-extent blocks are always legal.
    """
    if dim <= max_tile:
        return dim
    t = (max_tile // align) * align
    while t >= align:
        if dim % t == 0:
            return t
        t -= align
    return dim  # no aligned divisor: fall back to a single full-extent block


def siren_layer(x, w, b, *, w0=1.0, apply_sine=True,
                max_tm=256, max_tn=512, max_tk=512):
    """Fused y = sin(w0 * (x @ w + b)) (apply_sine=True) or y = x @ w + b."""
    assert isinstance(w0, (int, float)), (
        "w0 must be a static Python scalar; for a traced w0 pass it via an "
        "SMEM scalar instead of a closure.")
    assert jnp.issubdtype(x.dtype, jnp.floating), "float inputs only"

    M, K = x.shape
    K2, N = w.shape
    assert K == K2 and b.shape == (N,)
    b2 = b.reshape(1, N)

    tm = _pick_tile(M, max_tm, 8)
    tn = _pick_tile(N, max_tn, 128)
    tk = _pick_tile(K, max_tk, 128)
    grid = (M // tm, N // tn, K // tk)

    kernel = functools.partial(
        _siren_layer_kernel, w0=float(w0), apply_sine=bool(apply_sine))

    return pl.pallas_call(
        kernel,
        out_shape=jax.ShapeDtypeStruct((M, N), x.dtype),
        grid_spec=pltpu.PrefetchScalarGridSpec(
            num_scalar_prefetch=0,
            grid=grid,
            in_specs=[
                pl.BlockSpec((tm, tk), lambda i, j, k: (i, k)),
                pl.BlockSpec((tk, tn), lambda i, j, k: (k, j)),
                pl.BlockSpec((1, tn), lambda i, j, k: (0, j)),
            ],
            out_specs=pl.BlockSpec((tm, tn), lambda i, j, k: (i, j)),
            scratch_shapes=[pltpu.VMEM((tm, tn), jnp.float32)],
        ),
        compiler_params=pltpu.CompilerParams(
            dimension_semantics=("parallel", "parallel", "arbitrary"),
        ),
    )(x, w, b2)


# ---------------------------------------------------------------------------
# posenc: sinusoidal "wrap"-style encoding of (lon, lat) in degrees.
# Tiny, elementwise -> left to XLA on purpose.
# TODO(synk): spherical-harmonics posenc variant of SatCLIP not lowered here;
# posenc is an injected submodule, this implements the sinusoidal option.
# ---------------------------------------------------------------------------
def sinusoidal_posenc(coords, num_freqs=8):
    coords = coords.astype(jnp.float32)
    lonlat = coords * (jnp.pi / 180.0)                       # (B, 2) radians
    freqs = (2.0 ** jnp.arange(num_freqs, dtype=jnp.float32))  # (F,)
    ang = jnp.concatenate(
        [lonlat[:, 0:1] * freqs, lonlat[:, 1:2] * freqs], axis=-1)  # (B, 2F)
    return jnp.concatenate([jnp.sin(ang), jnp.cos(ang)], axis=-1)   # (B, 4F)


# ---------------------------------------------------------------------------
# SIREN nnet parameters + LocationEncoder forward
# ---------------------------------------------------------------------------
def init_location_encoder_params(key, dim_in, dim_hidden, dim_out,
                                 num_hidden_layers, w0, dtype=jnp.float32):
    fan_ins = [dim_in] + [dim_hidden] * num_hidden_layers
    fan_outs = [dim_hidden] * num_hidden_layers + [dim_out]
    params = []
    for idx, (fi, fo) in enumerate(zip(fan_ins, fan_outs)):
        key, kw, kb = jax.random.split(key, 3)
        bound = (1.0 / fi) if idx == 0 else ((6.0 / fi) ** 0.5 / w0)
        W = jax.random.uniform(kw, (fi, fo), dtype, -bound, bound)
        bvec = jax.random.uniform(kb, (fo,), dtype, -bound, bound)
        params.append((W, bvec))
    return params


def location_encoder_forward(coords, params, *, w0=1.0, w0_initial=30.0,
                             num_freqs=8):
    """Pallas forward: nnet(posenc(x)) with fused Linear+Sine layers."""
    h = sinusoidal_posenc(coords, num_freqs=num_freqs)
    n = len(params)
    for idx, (W, b) in enumerate(params):
        is_last = idx == n - 1
        layer_w0 = w0_initial if idx == 0 else w0
        h = siren_layer(h, W, b, w0=layer_w0, apply_sine=not is_last)
    return h


def location_encoder_reference(coords, params, *, w0=1.0, w0_initial=30.0,
                               num_freqs=8):
    """Pure-JAX reference mirroring the PyTorch module semantics."""
    h = sinusoidal_posenc(coords, num_freqs=num_freqs)
    n = len(params)
    for idx, (W, b) in enumerate(params):
        z = h @ W + b
        if idx < n - 1:
            layer_w0 = w0_initial if idx == 0 else w0
            h = jnp.sin(layer_w0 * z)
        else:
            h = z
    return h


if __name__ == "__main__":
    key = jax.random.PRNGKey(0)
    k_coords, k_params, k_big = jax.random.split(key, 3)

    # Small shapes consistent with LocationEncoder: a batch of (lon, lat) pairs.
    B, num_freqs, hidden, dim_out, n_hidden = 8, 8, 64, 32, 2
    dim_in = 4 * num_freqs
    lon = jax.random.uniform(k_coords, (B, 1), jnp.float32, -180.0, 180.0)
    lat = jax.random.uniform(jax.random.fold_in(k_coords, 1), (B, 1),
                             jnp.float32, -90.0, 90.0)
    coords = jnp.concatenate([lon, lat], axis=-1)  # (8, 2)

    params = init_location_encoder_params(
        k_params, dim_in, hidden, dim_out, n_hidden, w0=1.0)

    y = jax.block_until_ready(
        location_encoder_forward(coords, params, w0=1.0, w0_initial=30.0,
                                 num_freqs=num_freqs))
    y_ref = location_encoder_reference(coords, params, w0=1.0, w0_initial=30.0,
                                       num_freqs=num_freqs)
    assert y.shape == (B, dim_out) and y.dtype == coords.dtype
    assert jnp.allclose(y, y_ref, atol=2e-2, rtol=2e-2), \
        "LocationEncoder mismatch vs reference"

    # Exercise the K-reduction accumulator and N-tiling grid path of the fused
    # layer (grid > 1 in both the reduction and an output axis).
    xb = jax.random.normal(k_big, (8, 1024), jnp.float32) * 0.05
    Wb = jax.random.normal(jax.random.fold_in(k_big, 1), (1024, 640),
                           jnp.float32) * 0.03
    bb = jax.random.normal(jax.random.fold_in(k_big, 2), (640,),
                           jnp.float32) * 0.1
    yb = jax.block_until_ready(siren_layer(xb, Wb, bb, w0=1.0, apply_sine=True))
    yb_ref = jnp.sin(xb @ Wb + bb)
    assert jnp.allclose(yb, yb_ref, atol=2e-2, rtol=2e-2), \
        "fused SIREN layer mismatch vs reference"

    print("KERNEL_OK")
</pallas_src>

<mosaic_0001>
module attributes {stable_mosaic.version = 11 : i64} {
  func.func @_siren_layer_kernel(%arg0: i32, %arg1: i32, %arg2: i32, %arg3: memref<8x32xf32, #tpu.memory_space<vmem>>, %arg4: memref<32x64xf32, #tpu.memory_space<vmem>>, %arg5: memref<1x64xf32, #tpu.memory_space<vmem>>, %arg6: memref<8x64xf32, #tpu.memory_space<vmem>>, %arg7: memref<8x64xf32, #tpu.memory_space<vmem>>) attributes {dimension_semantics = [#tpu.dimension_semantics<parallel>, #tpu.dimension_semantics<parallel>, #tpu.dimension_semantics<arbitrary>], iteration_bounds = array<i64: 1, 1, 1>, scalar_prefetch = 0 : i64, scratch_operands = 1 : i64, tpu.core_type = #tpu.core_type<tc>, window_params = [{transform_indices = @transform_0, window_bounds = array<i64: 8, 32>}, {transform_indices = @transform_1, window_bounds = array<i64: 32, 64>}, {transform_indices = @transform_2, window_bounds = array<i64: 1, 64>}, {transform_indices = @transform_3, window_bounds = array<i64: 8, 64>}]} {
    %c0_i32 = arith.constant 0 : i32
    %0 = arith.cmpi eq, %arg2, %c0_i32 : i32
    %1 = arith.extui %0 : i1 to i32
    %c0_i32_0 = arith.constant 0 : i32
    %2 = arith.cmpi ne, %1, %c0_i32_0 : i32
    scf.if %2 {
      %cst_10 = arith.constant 0.000000e+00 : f32
      %12 = vector.broadcast %cst_10 : f32 to vector<8x64xf32>
      %c0_11 = arith.constant 0 : index
      %c0_12 = arith.constant 0 : index
      %13 = vector.load %arg7[%c0_11, %c0_12] : memref<8x64xf32, #tpu.memory_space<vmem>>, vector<8x64xf32>
      tpu.vector_store %arg7[%c0_11, %c0_12], %12 {strides = array<i32>} : memref<8x64xf32, #tpu.memory_space<vmem>>, vector<8x64xf32>,
    } else {
    }
    %c0 = arith.constant 0 : index
    %c0_1 = arith.constant 0 : index
    %3 = vector.load %arg7[%c0, %c0_1] : memref<8x64xf32, #tpu.memory_space<vmem>>, vector<8x64xf32>
    %c0_2 = arith.constant 0 : index
    %c0_3 = arith.constant 0 : index
    %4 = vector.load %arg3[%c0_2, %c0_3] : memref<8x32xf32, #tpu.memory_space<vmem>>, vector<8x32xf32>
    %c0_4 = arith.constant 0 : index
    %c0_5 = arith.constant 0 : index
    %5 = vector.load %arg4[%c0_4, %c0_5] : memref<32x64xf32, #tpu.memory_space<vmem>>, vector<32x64xf32>
    %cst = arith.constant dense<0.000000e+00> : vector<8x64xf32>
    %6 = tpu.matmul %4, %5, %cst {dimension_numbers = #tpu.dot_dimension_numbers<[1], [0], [0], [1], [0, 0, 1, 1], [], []>} : vector<8x32xf32>, vector<32x64xf32>, vector<8x64xf32> -> vector<8x64xf32>
    %7 = arith.addf %3, %6 : vector<8x64xf32>
    %c0_6 = arith.constant 0 : index
    %c0_7 = arith.constant 0 : index
    %8 = vector.load %arg7[%c0_6, %c0_7] : memref<8x64xf32, #tpu.memory_space<vmem>>, vector<8x64xf32>
    tpu.vector_store %arg7[%c0_6, %c0_7], %7 {strides = array<i32>} : memref<8x64xf32, #tpu.memory_space<vmem>>, vector<8x64xf32>,
    %c0_i32_8 = arith.constant 0 : i32
    %9 = arith.cmpi eq, %arg2, %c0_i32_8 : i32
    %10 = arith.extui %9 : i1 to i32
    %c0_i32_9 = arith.constant 0 : i32
    %11 = arith.cmpi ne, %10, %c0_i32_9 : i32
    scf.if %11 {
      %c0_10 = arith.constant 0 : index
      %c0_11 = arith.constant 0 : index
      %12 = vector.load %arg7[%c0_10, %c0_11] : memref<8x64xf32, #tpu.memory_space<vmem>>, vector<8x64xf32>
      %c0_12 = arith.constant 0 : index
      %c0_13 = arith.constant 0 : index
      %13 = vector.load %arg5[%c0_12, %c0_13] : memref<1x64xf32, #tpu.memory_space<vmem>>, vector<1x64xf32>
      %14 = vector.broadcast %13 : vector<1x64xf32> to vector<8x64xf32>
      %15 = arith.addf %12, %14 : vector<8x64xf32>
      %cst_14 = arith.constant 3.000000e+01 : f32
      %16 = vector.broadcast %cst_14 : f32 to vector<8x64xf32>
      %17 = arith.mulf %16, %15 : vector<8x64xf32>
      %18 = math.sin %17 : vector<8x64xf32>
      %c0_15 = arith.constant 0 : index
      %c0_16 = arith.constant 0 : index
      %19 = vector.load %arg6[%c0_15, %c0_16] : memref<8x64xf32, #tpu.memory_space<vmem>>, vector<8x64xf32>
      tpu.vector_store %arg6[%c0_15, %c0_16], %18 {strides = array<i32>} : memref<8x64xf32, #tpu.memory_space<vmem>>, vector<8x64xf32>,
    } else {
    }
    return
  }
  func.func @transform_0(%arg0: i32, %arg1: i32, %arg2: i32) -> (i32, i32) {
    %c0_i32 = arith.constant 0 : i32
    return %arg0, %arg2 : i32, i32
  }
  func.func @transform_1(%arg0: i32, %arg1: i32, %arg2: i32) -> (i32, i32) {
    %c0_i32 = arith.constant 0 : i32
    return %arg2, %arg1 : i32, i32
  }
  func.func @transform_2(%arg0: i32, %arg1: i32, %arg2: i32) -> (i32, i32) {
    %c0_i32 = arith.constant 0 : i32
    %c0_i32_0 = arith.constant 0 : i32
    return %c0_i32, %arg1 : i32, i32
  }
  func.func @transform_3(%arg0: i32, %arg1: i32, %arg2: i32) -> (i32, i32) {
    %c0_i32 = arith.constant 0 : i32
    return %arg0, %arg1 : i32, i32
  }
}

</mosaic_0001>

<llo_original>
// kernel: tpu_custom_call.1
$region0: #{tpu_custom_call.1}
  #allocation0 [shape = 'u32[]', space=smem, size = 0x4, offset = 0x4, fixed_abs, tag = 'smem constant byte address 0x4 - core index']
  #allocation1 [shape = 'u32[144,128]{1,0:T(1,128)}', space=vmem, size = 0x12000, scoped, tag = 'internal scratch']
  #allocation2 [shape = 'f32[8,64]{1,0:T(8,128)}', space=vmem, size = 0x1000, scoped, tag = 'scratch operand']
  %s0 = inlined_call_operand.hbm [shape: f32[8,32], index: 0, kind: input, shape index: {}]
  %s1 = inlined_call_operand.hbm [shape: f32[32,64], index: 1, kind: input, shape index: {}]
  %s2 = inlined_call_operand.vmem [shape: f32[1,64], index: 2, kind: input, shape index: {}]
  %s3 = inlined_call_operand.hbm [shape: f32[8,64], index: 3, kind: output, shape index: {}]
  %s4 = sld [smem:[#allocation0]]
  $region38: #{tpu_custom_call.1} parent=0
    _
  %s6 = ssub.s32 1, %s4
  %s7 = scalar_select 0, %s6, %s4
  $region1: #{tpu_custom_call.1} parent=0
    #allocation3 [shape = 'u8[4096]{0}', space=vmem, size = 0x1000, scoped, tag = 'input window, operand 0, single buffered']
    #allocation4 [shape = 's32[1]{0}', space=sflag, size = 0x4, scoped, tag = 'scoped memory for tpu_custom_call.1']
    #allocation5 [shape = 's32[1]{0}', space=sflag, size = 0x4, scoped, tag = 'scoped memory for tpu_custom_call.1']
    #allocation6 [shape = 'u8[16384]{0}', space=vmem, size = 0x4000, scoped, tag = 'input window, operand 1, single buffered']
    #allocation7 [shape = 's32[1]{0}', space=sflag, size = 0x4, scoped, tag = 'scoped memory for tpu_custom_call.1']
    #allocation8 [shape = 'u8[4096]{0}', space=vmem, size = 0x1000, scoped, tag = 'output window, operand 0, single buffered']
    %8 = vsyncpa [#allocation4], 0
    %9 = vsyncpa [#allocation7], 0
    %10 = vsyncpa [#allocation5], 0
    // Predicated region
    $region2: #{tpu_custom_call.1} parent=1 // pred_check
      _
    $region3: #{tpu_custom_call.1} parent=1 // pred_check_branch
      %12 = sbr.rel (0) target = $region5
    $region4: #{tpu_custom_call.1} parent=1 // pred_region
      %s14 = ssub.s32 128, 128
      %15 = vsyncadd [#allocation4], %s14
      %s17 = sshll.u32 [#allocation3], 4
      %s18 = int_to_ptr.vmem [resolvable:$true] %s17
      %20 = dma.hbm_to_vmem [thread:$0]  %s0, 128, %s18, [#allocation4]
    $region5: #{tpu_custom_call.1} parent=1 // pred_fallthru
      _
    // Predicated region
    $region6: #{tpu_custom_call.1} parent=1 // pred_check
      _
    $region7: #{tpu_custom_call.1} parent=1 // pred_check_branch
      %22 = sbr.rel (0) target = $region9
    $region8: #{tpu_custom_call.1} parent=1 // pred_region
      %s24 = ssub.s32 512, 512
      %25 = vsyncadd [#allocation7], %s24
      %s26 = sshll.u32 [#allocation6], 4
      %s27 = int_to_ptr.vmem [resolvable:$true] %s26
      %32 = dma.hbm_to_vmem [thread:$0]  %s1, 512, %s27, [#allocation7], 128, 128, 8
    $region9: #{tpu_custom_call.1} parent=1 // pred_fallthru
      _
    // Predicated region
    $region10: #{tpu_custom_call.1} parent=1 // pred_check
      _
    $region11: #{tpu_custom_call.1} parent=1 // pred_check_branch
      %34 = sbr.rel (0) target = $region13
    $region12: #{tpu_custom_call.1} parent=1 // pred_region
      _
    $region13: #{tpu_custom_call.1} parent=1 // pred_fallthru
      _
    // Predicated region
    $region14: #{tpu_custom_call.1} parent=1 // pred_check
      _
    $region15: #{tpu_custom_call.1} parent=1 // pred_check_branch
      %36 = sbr.rel (0) target = $region17
    $region16: #{tpu_custom_call.1} parent=1 // pred_region
      %37 = dma.done [#allocation4], 128
    $region17: #{tpu_custom_call.1} parent=1 // pred_fallthru
      _
    // Predicated region
    $region18: #{tpu_custom_call.1} parent=1 // pred_check
      _
    $region19: #{tpu_custom_call.1} parent=1 // pred_check_branch
      %39 = sbr.rel (0) target = $region21
    $region20: #{tpu_custom_call.1} parent=1 // pred_region
      %40 = dma.done [#allocation7], 512
    $region21: #{tpu_custom_call.1} parent=1 // pred_fallthru
      _
    %p41 = scmp.eq.s32.totalorder 0, 0
    // Predicated region
    $region22: #{tpu_custom_call.1} parent=1 // pred_check
      %p42 = pneg %p41
    $region23: #{tpu_custom_call.1} parent=1 // pred_check_branch
      %44 = sbr.rel (%p42) target = $region25
    $region24: #{tpu_custom_call.1} parent=1 // pred_region
      %vm45 = vcmask 523264
      %46 = vst.msk [vmem:[#allocation2] sm:$0xff] %vm45, 0.0
    $region25: #{tpu_custom_call.1} parent=1 // pred_fallthru
      _
    %v47 = vld [vmem:[#allocation2] sm:$0xff]
    %v48 = vld [vmem:[#allocation3] sm:$0xff]
    %v49 = vld [vmem:[#allocation6] sm:$0xff]
    %v50 = vld [vmem:[#allocation6 + $0x8] sm:$0xff]
    %v51 = vld [vmem:[#allocation6 + $0x10] sm:$0xff]
    %v52 = vld [vmem:[#allocation6 + $0x18] sm:$0xff]
    %vm53 = vcmask 261120
    %v55 = vsel %vm53, %v48, 0
    %57 = vmatprep.subr.mxu0 0.0
    %58 = vmatpush1.msra.mxu0 %v49
    %59 = vmatprep.subr.mxu0 0.0
    %60 = vmatpush1.msra.mxu0 %v50
    %61 = vmatprep.subr.mxu0 0.0
    %62 = vmatpush1.msra.mxu0 %v51
    %63 = vmatprep.subr.mxu0 0.0
    %64 = vmatpush1.msra.mxu0 %v52
    %65 = vmatprep.subr.mxu0 0.0
    %66 = vmatpush1.msra.mxu0 0.0
    %67 = vmatprep.subr.mxu0 0.0
    %68 = vmatpush1.msra.mxu0 0.0
    %69 = vmatprep.subr.mxu0 0.0
    %70 = vmatpush1.msra.mxu0 0.0
    %71 = vmatprep.subr.mxu0 0.0
    %72 = vmatpush1.msra.mxu0 0.0
    %73 = vmatprep.subr.mxu0 0.0
    %74 = vmatpush1.msra.mxu0 0.0
    %75 = vmatprep.subr.mxu0 0.0
    %76 = vmatpush1.msra.mxu0 0.0
    %77 = vmatprep.subr.mxu0 0.0
    %78 = vmatpush1.msra.mxu0 0.0
    %79 = vmatprep.subr.mxu0 0.0
    %80 = vmatpush1.msra.mxu0 0.0
    %81 = vmatprep.subr.mxu0 0.0
    %82 = vmatpush1.msra.mxu0 0.0
    %83 = vmatprep.subr.mxu0 0.0
    %84 = vmatpush1.msra.mxu0 0.0
    %85 = vmatprep.subr.mxu0 0.0
    %86 = vmatpush1.msra.mxu0 0.0
    %87 = vmatprep.subr.mxu0 0.0
    %88 = vmatpush1.msra.mxu0 0.0
    %89 = vmatprep.subr.mxu0 0.0
    %90 = vmatpush1.msra.mxu0 0.0
    %91 = vmatprep.subr.mxu0 0.0
    %92 = vmatpush1.msra.mxu0 0.0
    %93 = vmatprep.subr.mxu0 0.0
    %94 = vmatpush1.msra.mxu0 0.0
    %95 = vmatprep.subr.mxu0 0.0
    %96 = vmatpush1.msra.mxu0 0.0
    %97 = vmatprep.subr.mxu0 0.0
    %98 = vmatpush1.msra.mxu0 0.0
    %99 = vmatprep.subr.mxu0 0.0
    %100 = vmatpush1.msra.mxu0 0.0
    %101 = vmatprep.subr.mxu0 0.0
    %102 = vmatpush1.msra.mxu0 0.0
    %103 = vmatprep.subr.mxu0 0.0
    %104 = vmatpush1.msra.mxu0 0.0
    %105 = vmatprep.subr.mxu0 0.0
    %106 = vmatpush1.msra.mxu0 0.0
    %107 = vmatprep.subr.mxu0 0.0
    %108 = vmatpush1.msra.mxu0 0.0
    %109 = vmatprep.subr.mxu0 0.0
    %110 = vmatpush1.msra.mxu0 0.0
    %111 = vmatprep.subr.mxu0 0.0
    %112 = vmatpush1.msra.mxu0 0.0
    %113 = vmatprep.subr.mxu0 0.0
    %114 = vmatpush1.msra.mxu0 0.0
    %115 = vmatprep.subr.mxu0 0.0
    %116 = vmatpush1.msra.mxu0 0.0
    %117 = vmatprep.subr.mxu0 0.0
    %118 = vmatpush1.msra.mxu0 0.0
    %119 = vmatprep.subr.mxu0 0.0
    %120 = vmatpush1.msra.mxu0 0.0
    %121 = vmatprep.mubr.f32.mxu0 0.0
    %122 = vmatmul.mubr.f32.gmra.mrb[0].mxu0 %v55
    %v123 = vpop.f32.mrb[0].mxu0
    %v124 = vadd.f32 0.0, %v123
    %v125 = vpop.f32.mrb[0].mxu0
    %126 = vdwg.mxu0
    %v127 = vadd.f32 %v47, %v124
    %vm128 = vcmask 523264
    %129 = vst.msk [vmem:[#allocation2] sm:$0xff] %vm128, %v127
    // Predicated region
    $region26: #{tpu_custom_call.1} parent=1 // pred_check
      %p130 = pneg %p41
    $region27: #{tpu_custom_call.1} parent=1 // pred_check_branch
      %132 = sbr.rel (%p130) target = $region29
    $region28: #{tpu_custom_call.1} parent=1 // pred_region
      %v133 = vld [vmem:[#allocation2] sm:$0xff]
      %v134 = vld [vmem:[%s2] sm:$0x1]
      %v136 = vlaneseq
      %v137 = vshrl.u32 %v136, 7
      %v138 = vsub.s32 0, %v137
      %v139 = vrot.slane %v134, %v138
      %v141 = vadd.f32 %v133, %v139
      %v142 = vmul.f32 %v141, 30.0
      %v143 = vand.u32 2147483647, %v142
      %vm144 = vcmp.le.f32.partialorder %v143, 0.7853982
      %vm145 = vcmp.lt.s32.totalorder %v142, 0
      %v146 = vand.u32 %v142, 2139095040
      %v147 = vshrl.u32 %v146, 23
      %v148 = vsub.s32 %v147, 127
      %v149 = vand.u32 2147483647, %v142
      %v150 = vand.u32 %v149, 8388607
      %v151 = vor.u32 %v150, 8388608
      %v152 = vsub.s32 0, %v151
      %v153 = vadd.s32 %v148, 1
      %vm154 = vcmp.gt.s32.totalorder %v153, 0
      %v155 = vsel %vm154, %v153, 0
      %v156 = vshrl.u32 %v155, 5
      %v157 = vand.u32 %v155, 31
      %v158 = vsub.s32 32, %v157
      %v159 = vshrl.u32 683565275, %v158
      %v160 = vshll.u32 683565275, %v157
      %v161 = vshrl.u32 2475754826, %v158
      %v162 = vor.u32 %v160, %v161
      %v163 = vshll.u32 2475754826, %v157
      %v164 = vshrl.u32 2131351028, %v158
      %v165 = vor.u32 %v163, %v164
      %v166 = vshll.u32 2131351028, %v157
      %v167 = vshrl.u32 2102212464, %v158
      %v168 = vor.u32 %v166, %v167
      %v169 = vshll.u32 2102212464, %v157
      %v170 = vshrl.u32 920167782, %v158
      %v171 = vor.u32 %v169, %v170
      %v172 = vshll.u32 920167782, %v157
      %v173 = vshrl.u32 1326507024, %v158
      %v174 = vor.u32 %v172, %v173
      %vm175 = vcmp.lt.s32.totalorder %v156, 1
      %vm176 = vcmp.lt.s32.totalorder %v156, 2
      %vm177 = vcmp.lt.s32.totalorder %v156, 3
      %vm178 = vcmp.lt.s32.totalorder %v156, 4
      %v179 = vsel %vm175, %v159, %v162
      %v180 = vsel %vm178, %v168, 2102212464
      %v181 = vsel %vm177, %v165, %v180
      %v182 = vsel %vm176, %v179, %v181
      %v183 = vsel %vm175, %v162, %v165
      %v184 = vsel %vm178, %v171, 920167782
      %v185 = vsel %vm177, %v168, %v184
      %v186 = vsel %vm176, %v183, %v185
      %v187 = vsel %vm175, %v165, %v168
      %v188 = vsel %vm178, %v174, 1326507024
      %v189 = vsel %vm177, %v171, %v188
      %v190 = vsel %vm176, %v187, %v189
      %v191 = vshll.u32 %v151, 8
      %v192 = vmul.u32.u64.compose %v191, %v190
      %v193 = vextract.low.u32 %v192
      %v194 = vextract.high.u32 %v192
      %v195 = vmul.u32.u64.compose %v191, %v186
      %v196 = vextract.low.u32 %v195
      %v197 = vextract.high.u32 %v195
      %v198 = vmul.u32 %v191, %v182
      %v199 = vadd.s32 %v194, %v196
      %vm200 = vc.u32 %v194, %v196
      %v201 = vadd.s32 %v197, 1
      %v202 = vsel %vm200, %v201, %v197
      %v203 = vadd.s32 %v198, %v202
      %v204 = vadd.s32 %v203, 536870912
      %v205 = vshrl.u32 %v204, 30
      %v206 = vshll.u32 %v205, 30
      %v207 = vsub.s32 %v203, %v206
      %vm208 = vcmp.lt.s32.totalorder %v207, 0
      %v209 = vsub.s32 0, %v207
      %v210 = vsel %vm208, %v209, %v207
      %v211 = vclz %v210
      %v212 = vsub.s32 %v211, 2
      %vm213 = vcmp.gt.s32.totalorder 0, %v212
      %v214 = vsel %vm213, 0, %v212
      %v215 = vsub.s32 32, %v214
      %v216 = vshll.u32 %v207, %v214
      %v217 = vshrl.u32 %v199, %v215
      %v218 = vor.u32 %v216, %v217
      %v219 = vsub.s32 4294967266, %v214
      %v220 = vadd.s32 %v219, 127
      %v221 = vshll.u32 %v220, 23
      %v222 = vor.u32 4788187, %v221
      %v223 = vand.u32 2147483647, %v222
      %v225 = vcvt.s32.f32 %v218
      %v226 = vmul.f32 %v225, %v223
      %v227 = vxor.u32 %v226, 2147483648
      %v228 = vsel %vm145, %v227, %v226
      %v229 = vsub.s32 4, %v205
      %v230 = vsel %vm145, %v229, %v205
      %v231 = vsel %vm144, %v142, %v228
      %v232 = vsel %vm144, 0, %v230
      %v233 = vcosq.f32.pop %v231
      %v234 = vsinq.f32.pop %v231
      %vm235 = vweird.f32 %v142
      %v236 = vadd.s32 %v232, 3
      %v237 = vand.u32 %v236, 3
      %vm238 = vcmp.lt.s32.totalorder %v237, 2
      %vm239 = vcmp.eq.s32.totalorder %v237, 0
      %v240 = vxor.u32 %v234, 2147483648
      %v241 = vsel %vm239, %v233, %v240
      %vm242 = vcmp.eq.s32.totalorder %v237, 2
      %v243 = vxor.u32 %v233, 2147483648
      %v244 = vsel %vm242, %v243, %v234
      %v245 = vsel %vm238, %v241, %v244
      %v246 = vsel %vm235, nan, %v245
      %247 = vst.msk [vmem:[#allocation8] sm:$0xff] %vm128, %v246
    $region29: #{tpu_custom_call.1} parent=1 // pred_fallthru
      _
    // Predicated region
    $region30: #{tpu_custom_call.1} parent=1 // pred_check
      _
    $region31: #{tpu_custom_call.1} parent=1 // pred_check_branch
      %249 = sbr.rel (0) target = $region33
    $region32: #{tpu_custom_call.1} parent=1 // pred_region
      %s251 = ssub.s32 128, 128
      %252 = vsyncadd [#allocation5], %s251
      %s254 = sshll.u32 [#allocation8], 4
      %s255 = int_to_ptr.vmem [resolvable:$true] %s254
      %257 = dma.vmem_to_hbm [thread:$0]  %s255, 128, %s3, [#allocation5]
    $region33: #{tpu_custom_call.1} parent=1 // pred_fallthru
      _
    // Predicated region
    $region34: #{tpu_custom_call.1} parent=1 // pred_check
      _
    $region35: #{tpu_custom_call.1} parent=1 // pred_check_branch
      %259 = sbr.rel (0) target = $region37
    $region36: #{tpu_custom_call.1} parent=1 // pred_region
      %260 = dma.done [#allocation5], 128
    $region37: #{tpu_custom_call.1} parent=1 // pred_fallthru
      _
    %261 = vsyncpa [#allocation4], 1
    %262 = vsyncpa [#allocation7], 1
    %263 = vsyncpa [#allocation5], 1

</llo_original>
